<compile_context>
chip_gen: v6e
topology: v6e:2x2x1
jax: 0.10.0
libtpu: 0.0.40
codegen_flags: <defaults>
</compile_context>

<pallas_src>
import collections
import functools

import jax
import jax.numpy as jnp
from jax.experimental import pallas as pl
from jax.experimental.pallas import tpu as pltpu


def _round_up(n, m):
    return ((n + m - 1) // m) * m


# ----------------------------------------------------------------------------
# Kernel body: 2 matmuls + f32 epilogue.  BN already folded into W/b.
# ----------------------------------------------------------------------------
def _residual_block_kernel(x_ref, w1_ref, b1_ref, w2_ref, b2_ref, o_ref, *,
                           negative_slope):
    """out = leaky(x + (W2 @ leaky(W1 @ x + b1) + b2)); W/b are BN-folded."""
    x = x_ref[...]                                              # (tile_b, in_p) f32
    # Cast to the weight dtype only right before the MXU; accumulate in f32.
    h = jnp.dot(x.astype(w1_ref.dtype), w1_ref[...],
                preferred_element_type=jnp.float32) + b1_ref[...]
    h = jnp.where(h > 0, h, negative_slope * h)                 # LeakyReLU(0.2); Dropout = identity (eval)
    y = jnp.dot(h.astype(w2_ref.dtype), w2_ref[...],
                preferred_element_type=jnp.float32) + b2_ref[...]
    z = x + y                                                   # residual add (f32 epilogue)
    o_ref[...] = jnp.where(z > 0, z, negative_slope * z).astype(o_ref.dtype)


# ----------------------------------------------------------------------------
# One-time parameter preparation (hoisted out of the per-call hot path).
# ----------------------------------------------------------------------------
FoldedResidualBlock = collections.namedtuple(
    "FoldedResidualBlock",
    ["W1p", "b1p", "W2p", "b2p", "in_dim", "hidden", "in_p", "hid_p"])


def fold_and_pad_params(params, *, eps=1e-5, compute_dtype=jnp.float32):
    """Fold eval-mode BatchNorm1d into the Linears (exact) and zero-pad to 128 lanes.

    params: (W1,b1,g1,be1,m1,v1, W2,b2,g2,be2,m2,v2) with
      W1: (in_dim, hidden)  [transpose of PyTorch nn.Linear.weight], b1: (hidden,)
      W2: (hidden, in_dim), b2: (in_dim,)
      g*/be*/m*/v*: BatchNorm1d weight / bias / running_mean / running_var.
    compute_dtype: dtype of the stored (MXU-input) weights; biases stay f32.
    """
    (W1, b1, g1, be1, m1, v1, W2, b2, g2, be2, m2, v2) = params
    in_dim, hidden = W1.shape
    assert W2.shape == (hidden, in_dim)

    s1 = g1 / jnp.sqrt(v1 + eps)
    t1 = be1 - m1 * s1
    W1f = W1 * s1[None, :]
    b1f = b1 * s1 + t1
    s2 = g2 / jnp.sqrt(v2 + eps)
    t2 = be2 - m2 * s2
    W2f = W2 * s2[None, :]
    b2f = b2 * s2 + t2

    in_p = _round_up(in_dim, 128)
    hid_p = _round_up(hidden, 128)
    W1p = jnp.zeros((in_p, hid_p), compute_dtype).at[:in_dim, :hidden].set(
        W1f.astype(compute_dtype))
    b1p = jnp.zeros((1, hid_p), jnp.float32).at[0, :hidden].set(b1f)
    W2p = jnp.zeros((hid_p, in_p), compute_dtype).at[:hidden, :in_dim].set(
        W2f.astype(compute_dtype))
    b2p = jnp.zeros((1, in_p), jnp.float32).at[0, :in_dim].set(b2f)
    return FoldedResidualBlock(W1p, b1p, W2p, b2p, in_dim, hidden, in_p, hid_p)


# ----------------------------------------------------------------------------
# Padded-layout activation helpers (pad/unpad only at the network boundary).
# ----------------------------------------------------------------------------
def pad_activations(x, folded):
    """(B, in_dim) -> zero-padded (B_pad, in_p) f32.  Do this once per network."""
    B, in_dim = x.shape
    assert in_dim == folded.in_dim
    B_pad = _round_up(B, 8)
    xp = jnp.zeros((B_pad, folded.in_p), jnp.float32)
    return xp.at[:B, :in_dim].set(x.astype(jnp.float32))


def unpad_activations(xp, folded, batch):
    """Padded (B_pad, in_p) -> (batch, in_dim).  Padded rows hold garbage by design."""
    return xp[:batch, :folded.in_dim]


def _choose_tile(B_pad, tile_b):
    # Keep >= 2 grid steps whenever the batch allows so v7x's two TensorCores
    # (dimension_semantics=("parallel",)) both get work; tile must divide B_pad.
    if B_pad >= 16:
        tile_b = min(tile_b, B_pad // 2)
    else:
        tile_b = B_pad
    tile_b = max(8, (tile_b // 8) * 8)
    while B_pad % tile_b:
        tile_b -= 8
    return tile_b


def residual_block_apply_padded(xp, folded, *, negative_slope=0.2, tile_b=512):
    """Apply one ResidualBlock on already-padded activations (B_pad, in_p) f32.

    Padded feature columns stay exactly zero (padded W/b rows+cols are zero),
    so calls can be chained for stacked blocks without re-padding.
    Padded batch rows contain harmless garbage that is discarded at unpad time.
    """
    B_pad, in_p = xp.shape
    assert in_p == folded.in_p and B_pad % 8 == 0
    tb = _choose_tile(B_pad, tile_b)
    grid = (B_pad // tb,)

    wbytes = jnp.dtype(folded.W1p.dtype).itemsize
    weight_bytes = 2 * folded.in_p * folded.hid_p * wbytes + (folded.hid_p + folded.in_p) * 4
    act_bytes = 2 * B_pad * in_p * 4                      # x read + out write
    cost = pl.CostEstimate(
        flops=4 * B_pad * folded.in_p * folded.hid_p,     # 2 matmuls x 2 flops/MAC
        transcendentals=0,
        bytes_accessed=weight_bytes + act_bytes)

    # VMEM budget: single-buffered weights/biases + double-buffered x/out tiles
    # (generous headroom; fits comfortably in v7x's 64 MiB as well).
    vmem_need = weight_bytes + 2 * 2 * tb * in_p * 4
    vmem_limit = int(min(128 * 1024 * 1024, max(16 * 1024 * 1024, 2 * vmem_need)))

    kernel = functools.partial(_residual_block_kernel, negative_slope=negative_slope)
    vmem = pltpu.MemorySpace.VMEM
    return pl.pallas_call(
        kernel,
        out_shape=jax.ShapeDtypeStruct((B_pad, in_p), jnp.float32),
        grid=grid,
        in_specs=[
            pl.BlockSpec((tb, in_p), lambda i: (i, 0)),   # x tile (pipelined over batch)
            pl.BlockSpec(memory_space=vmem),              # W1: whole array, loaded once, single-buffered
            pl.BlockSpec(memory_space=vmem),              # b1
            pl.BlockSpec(memory_space=vmem),              # W2
            pl.BlockSpec(memory_space=vmem),              # b2
        ],
        out_specs=pl.BlockSpec((tb, in_p), lambda i: (i, 0)),
        compiler_params=pltpu.CompilerParams(
            dimension_semantics=("parallel",),
            vmem_limit_bytes=vmem_limit,
        ),
        cost_estimate=cost,
    )(xp, folded.W1p, folded.b1p, folded.W2p, folded.b2p)


def residual_block_forward(x, folded, *, negative_slope=0.2, tile_b=512):
    """Boundary entry point: pad -> fused kernel -> unpad.  x: (B, in_dim) f32."""
    B = x.shape[0]
    xp = pad_activations(x, folded)
    yp = residual_block_apply_padded(xp, folded, negative_slope=negative_slope,
                                     tile_b=tile_b)
    return unpad_activations(yp, folded, B)


# ----------------------------------------------------------------------------
# Deterministic params + pure-JAX reference (un-folded BN, source of truth).
# ----------------------------------------------------------------------------
def init_residual_block_params(key, in_dim, hidden_dim):
    ks = jax.random.split(key, 12)
    bound1 = 1.0 / jnp.sqrt(jnp.float32(in_dim))
    W1 = jax.random.uniform(ks[0], (in_dim, hidden_dim), jnp.float32, -bound1, bound1)
    b1 = jax.random.uniform(ks[1], (hidden_dim,), jnp.float32, -bound1, bound1)
    g1 = jax.random.uniform(ks[2], (hidden_dim,), jnp.float32, 0.5, 1.5)
    be1 = jax.random.uniform(ks[3], (hidden_dim,), jnp.float32, -0.5, 0.5)
    m1 = jax.random.uniform(ks[4], (hidden_dim,), jnp.float32, -0.5, 0.5)
    v1 = jax.random.uniform(ks[5], (hidden_dim,), jnp.float32, 0.5, 1.5)
    bound2 = 1.0 / jnp.sqrt(jnp.float32(hidden_dim))
    W2 = jax.random.uniform(ks[6], (hidden_dim, in_dim), jnp.float32, -bound2, bound2)
    b2 = jax.random.uniform(ks[7], (in_dim,), jnp.float32, -bound2, bound2)
    g2 = jax.random.uniform(ks[8], (in_dim,), jnp.float32, 0.5, 1.5)
    be2 = jax.random.uniform(ks[9], (in_dim,), jnp.float32, -0.5, 0.5)
    m2 = jax.random.uniform(ks[10], (in_dim,), jnp.float32, -0.5, 0.5)
    v2 = jax.random.uniform(ks[11], (in_dim,), jnp.float32, 0.5, 1.5)
    return (W1, b1, g1, be1, m1, v1, W2, b2, g2, be2, m2, v2)


def _reference_forward(x, params, negative_slope=0.2, eps=1e-5):
    (W1, b1, g1, be1, m1, v1, W2, b2, g2, be2, m2, v2) = params
    h = x @ W1 + b1
    h = (h - m1) / jnp.sqrt(v1 + eps) * g1 + be1
    h = jnp.where(h > 0, h, negative_slope * h)
    y = h @ W2 + b2
    y = (y - m2) / jnp.sqrt(v2 + eps) * g2 + be2
    z = x + y
    return jnp.where(z > 0, z, negative_slope * z)


if __name__ == "__main__":
    batch = 16
    in_dim = 32
    hidden_dim = 64

    key = jax.random.PRNGKey(0)
    key, kx, kp1, kp2 = jax.random.split(key, 4)
    x = jax.random.normal(kx, (batch, in_dim), jnp.float32)
    params1 = init_residual_block_params(kp1, in_dim, hidden_dim)
    params2 = init_residual_block_params(kp2, in_dim, hidden_dim)

    # BN-fold + padding hoisted out of the hot path (done once).
    folded1 = fold_and_pad_params(params1)
    folded2 = fold_and_pad_params(params2)

    # 1) Single block, f32 weights.
    out = jax.block_until_ready(residual_block_forward(x, folded1))
    ref = _reference_forward(x, params1)
    assert out.shape == (batch, in_dim)
    assert jnp.allclose(out, ref, atol=1e-4, rtol=1e-4)

    # 2) Two stacked blocks: pad once, stay in padded layout, unpad once.
    xp = pad_activations(x, folded1)
    xp = residual_block_apply_padded(xp, folded1)
    xp = residual_block_apply_padded(xp, folded2)
    out2 = jax.block_until_ready(unpad_activations(xp, folded2, batch))
    ref2 = _reference_forward(_reference_forward(x, params1), params2)
    assert jnp.allclose(out2, ref2, atol=1e-3, rtol=1e-3)

    # 3) bf16 weights (v6e/v7x-friendly), f32 accumulation + f32 epilogue.
    folded_bf16 = fold_and_pad_params(params1, compute_dtype=jnp.bfloat16)
    out_bf16 = jax.block_until_ready(residual_block_forward(x, folded_bf16))
    assert jnp.allclose(out_bf16, ref, atol=5e-2, rtol=5e-2)

    print("KERNEL_OK")
</pallas_src>

<mosaic_0001>
module attributes {stable_mosaic.version = 11 : i64} {
  func.func @_residual_block_kernel(%arg0: i32, %arg1: memref<8x128xf32, #tpu.memory_space<vmem>>, %arg2: memref<128x128xf32, #tpu.memory_space<vmem>>, %arg3: memref<1x128xf32, #tpu.memory_space<vmem>>, %arg4: memref<128x128xf32, #tpu.memory_space<vmem>>, %arg5: memref<1x128xf32, #tpu.memory_space<vmem>>, %arg6: memref<8x128xf32, #tpu.memory_space<vmem>>) attributes {dimension_semantics = [#tpu.dimension_semantics<parallel>], iteration_bounds = array<i64: 2>, scalar_prefetch = 0 : i64, scratch_operands = 0 : i64, tpu.core_type = #tpu.core_type<tc>, window_params = [{transform_indices = @transform_0, window_bounds = array<i64: 8, 128>}, {pipeline_mode = #tpu.pipeline_mode<synchronous>, transform_indices = @transform_1, window_bounds = array<i64: 128, 128>}, {pipeline_mode = #tpu.pipeline_mode<synchronous>, transform_indices = @transform_2, window_bounds = array<i64: 1, 128>}, {pipeline_mode = #tpu.pipeline_mode<synchronous>, transform_indices = @transform_3, window_bounds = array<i64: 128, 128>}, {pipeline_mode = #tpu.pipeline_mode<synchronous>, transform_indices = @transform_4, window_bounds = array<i64: 1, 128>}, {transform_indices = @transform_5, window_bounds = array<i64: 8, 128>}]} {
    %c0 = arith.constant 0 : index
    %c0_0 = arith.constant 0 : index
    %0 = vector.load %arg1[%c0, %c0_0] : memref<8x128xf32, #tpu.memory_space<vmem>>, vector<8x128xf32>
    %c0_1 = arith.constant 0 : index
    %c0_2 = arith.constant 0 : index
    %1 = vector.load %arg2[%c0_1, %c0_2] : memref<128x128xf32, #tpu.memory_space<vmem>>, vector<128x128xf32>
    %cst = arith.constant dense<0.000000e+00> : vector<8x128xf32>
    %2 = tpu.matmul %0, %1, %cst {dimension_numbers = #tpu.dot_dimension_numbers<[1], [0], [0], [1], [0, 0, 1, 1], [], []>} : vector<8x128xf32>, vector<128x128xf32>, vector<8x128xf32> -> vector<8x128xf32>
    %c0_3 = arith.constant 0 : index
    %c0_4 = arith.constant 0 : index
    %3 = vector.load %arg3[%c0_3, %c0_4] : memref<1x128xf32, #tpu.memory_space<vmem>>, vector<1x128xf32>
    %4 = vector.broadcast %3 : vector<1x128xf32> to vector<8x128xf32>
    %5 = arith.addf %2, %4 : vector<8x128xf32>
    %cst_5 = arith.constant 0.000000e+00 : f32
    %6 = vector.broadcast %cst_5 : f32 to vector<8x128xf32>
    %7 = arith.cmpf ogt, %5, %6 : vector<8x128xf32>
    %cst_6 = arith.constant 2.000000e-01 : f32
    %8 = vector.broadcast %cst_6 : f32 to vector<8x128xf32>
    %9 = arith.mulf %8, %5 : vector<8x128xf32>
    %10 = arith.select %7, %5, %9 : vector<8x128xi1>, vector<8x128xf32>
    %c0_7 = arith.constant 0 : index
    %c0_8 = arith.constant 0 : index
    %11 = vector.load %arg4[%c0_7, %c0_8] : memref<128x128xf32, #tpu.memory_space<vmem>>, vector<128x128xf32>
    %cst_9 = arith.constant dense<0.000000e+00> : vector<8x128xf32>
    %12 = tpu.matmul %10, %11, %cst_9 {dimension_numbers = #tpu.dot_dimension_numbers<[1], [0], [0], [1], [0, 0, 1, 1], [], []>} : vector<8x128xf32>, vector<128x128xf32>, vector<8x128xf32> -> vector<8x128xf32>
    %c0_10 = arith.constant 0 : index
    %c0_11 = arith.constant 0 : index
    %13 = vector.load %arg5[%c0_10, %c0_11] : memref<1x128xf32, #tpu.memory_space<vmem>>, vector<1x128xf32>
    %14 = vector.broadcast %13 : vector<1x128xf32> to vector<8x128xf32>
    %15 = arith.addf %12, %14 : vector<8x128xf32>
    %16 = arith.addf %0, %15 : vector<8x128xf32>
    %cst_12 = arith.constant 0.000000e+00 : f32
    %17 = vector.broadcast %cst_12 : f32 to vector<8x128xf32>
    %18 = arith.cmpf ogt, %16, %17 : vector<8x128xf32>
    %cst_13 = arith.constant 2.000000e-01 : f32
    %19 = vector.broadcast %cst_13 : f32 to vector<8x128xf32>
    %20 = arith.mulf %19, %16 : vector<8x128xf32>
    %21 = arith.select %18, %16, %20 : vector<8x128xi1>, vector<8x128xf32>
    %c0_14 = arith.constant 0 : index
    %c0_15 = arith.constant 0 : index
    %22 = vector.load %arg6[%c0_14, %c0_15] : memref<8x128xf32, #tpu.memory_space<vmem>>, vector<8x128xf32>
    tpu.vector_store %arg6[%c0_14, %c0_15], %21 {strides = array<i32>} : memref<8x128xf32, #tpu.memory_space<vmem>>, vector<8x128xf32>,
    return
  }
  func.func @transform_0(%arg0: i32) -> (i32, i32) {
    %c0_i32 = arith.constant 0 : i32
    %c0_i32_0 = arith.constant 0 : i32
    return %arg0, %c0_i32 : i32, i32
  }
  func.func @transform_1(%arg0: i32) -> (i32, i32) {
    %c0_i32 = arith.constant 0 : i32
    %c0_i32_0 = arith.constant 0 : i32
    %c0_i32_1 = arith.constant 0 : i32
    return %c0_i32, %c0_i32_0 : i32, i32
  }
  func.func @transform_2(%arg0: i32) -> (i32, i32) {
    %c0_i32 = arith.constant 0 : i32
    %c0_i32_0 = arith.constant 0 : i32
    %c0_i32_1 = arith.constant 0 : i32
    return %c0_i32, %c0_i32_0 : i32, i32
  }
  func.func @transform_3(%arg0: i32) -> (i32, i32) {
    %c0_i32 = arith.constant 0 : i32
    %c0_i32_0 = arith.constant 0 : i32
    %c0_i32_1 = arith.constant 0 : i32
    return %c0_i32, %c0_i32_0 : i32, i32
  }
  func.func @transform_4(%arg0: i32) -> (i32, i32) {
    %c0_i32 = arith.constant 0 : i32
    %c0_i32_0 = arith.constant 0 : i32
    %c0_i32_1 = arith.constant 0 : i32
    return %c0_i32, %c0_i32_0 : i32, i32
  }
  func.func @transform_5(%arg0: i32) -> (i32, i32) {
    %c0_i32 = arith.constant 0 : i32
    %c0_i32_0 = arith.constant 0 : i32
    return %arg0, %c0_i32 : i32, i32
  }
}

</mosaic_0001>

<llo_original>
// kernel: tpu_custom_call.1
$region0: #{tpu_custom_call.1}
  #allocation0 [shape = 'u32[]', space=smem, size = 0x4, offset = 0x4, fixed_abs, tag = 'smem constant byte address 0x4 - core index']
  #allocation1 [shape = 'u32[144,128]{1,0:T(1,128)}', space=vmem, size = 0x12000, scoped, tag = 'internal scratch']
  %s0 = inlined_call_operand.hbm [shape: f32[16,128], index: 0, kind: input, shape index: {}]
  %s1 = inlined_call_operand.hbm [shape: f32[128,128], index: 1, kind: input, shape index: {}]
  %s2 = inlined_call_operand.vmem [shape: f32[1,128], index: 2, kind: input, shape index: {}]
  %s3 = inlined_call_operand.hbm [shape: f32[128,128], index: 3, kind: input, shape index: {}]
  %s4 = inlined_call_operand.vmem [shape: f32[1,128], index: 4, kind: input, shape index: {}]
  %s5 = inlined_call_operand.hbm [shape: f32[16,128], index: 5, kind: output, shape index: {}]
  %s6 = sld [smem:[#allocation0]]
  $region65: #{tpu_custom_call.1} parent=0
    _
  %s8 = ssub.s32 1, %s6
  %s9 = scalar_select 0, %s8, %s6
  $region1: #{tpu_custom_call.1} parent=0
    #allocation2 [shape = 'u8[8192]{0}', space=vmem, size = 0x2000, scoped, tag = 'input window, operand 0']
    #allocation3 [shape = 's32[2]{0}', space=sflag, size = 0x8, scoped, tag = 'scoped memory for tpu_custom_call.1']
    #allocation4 [shape = 's32[2]{0}', space=sflag, size = 0x8, scoped, tag = 'scoped memory for tpu_custom_call.1']
    #allocation5 [shape = 'u8[65536]{0}', space=vmem, size = 0x10000, scoped, tag = 'input window, operand 1, single buffered']
    #allocation6 [shape = 's32[1]{0}', space=sflag, size = 0x4, scoped, tag = 'scoped memory for tpu_custom_call.1']
    #allocation7 [shape = 'u8[65536]{0}', space=vmem, size = 0x10000, scoped, tag = 'input window, operand 3, single buffered']
    #allocation8 [shape = 'u8[8192]{0}', space=vmem, size = 0x2000, scoped, tag = 'output window, operand 0']
    %10 = vsyncpa [#allocation3], 0
    %s11 = scalar_lea.sflag [#allocation3], 1
    %12 = vsyncpa %s11, 0
    %13 = vsyncpa [#allocation6], 0
    %14 = vsyncpa [#allocation4], 0
    %s15 = scalar_lea.sflag [#allocation4], 1
    %16 = vsyncpa %s15, 0
    loop: start=0, step=1, limit=4
    $region2: #{tpu_custom_call.1} parent=1 // loop_pre_header
      _
    $region3: #{tpu_custom_call.1} parent=1 // loop_header
      %s18 = sphi 0, %s22
      %p19 = scmp.ge.s32.totalorder %s18, 4
      %s28 = sphi 0, %s30
      %s31 = sphi 0, %s28
      %s32 = sphi 0, %s31
      %s48 = sphi 0, %s32
      %s52 = sphi 0, %s52
      %s54 = sphi 0, %s52
      %s55 = sphi 0, %s54
      %s69 = sphi 0, %s55
      %s73 = sphi 0, %s73
      %s75 = sphi 0, %s73
      %s76 = sphi 0, %s75
      %s90 = sphi 0, %s76
      %s94 = sphi 0, %s94
      %s96 = sphi 0, %s94
      %s97 = sphi 0, %s96
      %s111 = sphi 0, %s97
      %s115 = sphi 0, %s115
      %s117 = sphi 0, %s115
      %s118 = sphi 0, %s117
      %s132 = sphi 0, %s118
      %s138 = sphi 0, %s140
      %s141 = sphi 0, %s138
      %s142 = sphi 0, %s141
      %s158 = sphi 0, %s142
    $region4: #{tpu_custom_call.1} parent=1 // loop_header_branch
      %21 = sbr.rel (%p19) target = $region8
    $region5: #{tpu_custom_call.1} parent=1 // loop_body
      %s23 = ssub.s32 %s18, 1
      %s24 = ssub.s32 %s18, 2
      %s25 = sadd.s32 %s18, 1
      %s26 = ssub.s32 %s18, %s25
      %p27 = scmp.eq.s32.totalorder %s26, 0
      %s29 = sadd.s32 %s28, 1
      %s30 = scalar_select %p27, %s28, %s29
      %p33 = pneg %p27
      %p34 = scmp.eq.s32.totalorder %s18, 1
      %p35 = por %p33, %p34
      %p36 = scmp.ne.s32.totalorder %s28, %s31
      %p37 = scmp.eq.s32.totalorder %s18, 0
      %p38 = por %p36, %p37
      %p39 = scmp.ne.s32.totalorder %s28, %s31
      %p40 = scmp.eq.s32.totalorder %s23, 1
      %p41 = por %p39, %p40
      %p42 = scmp.ne.s32.totalorder %s31, %s32
      %p43 = scmp.eq.s32.totalorder %s23, 0
      %p44 = por %p42, %p43
      %p45 = scmp.ne.s32.totalorder %s31, %s32
      %p46 = scmp.eq.s32.totalorder %s24, 1
      %p47 = por %p45, %p46
      %p49 = scmp.ne.s32.totalorder %s32, %s48
      %p50 = scmp.eq.s32.totalorder %s24, 0
      %p51 = por %p49, %p50
      %s53 = sadd.s32 %s52, 1
      %p56 = scmp.eq.s32.totalorder %s18, 1
      %p57 = scmp.ne.s32.totalorder %s52, %s54
      %p58 = scmp.eq.s32.totalorder %s18, 0
      %p59 = por %p57, %p58
      %p60 = scmp.ne.s32.totalorder %s52, %s54
      %p61 = scmp.eq.s32.totalorder %s23, 1
      %p62 = por %p60, %p61
      %p63 = scmp.ne.s32.totalorder %s54, %s55
      %p64 = scmp.eq.s32.totalorder %s23, 0
      %p65 = por %p63, %p64
      %p66 = scmp.ne.s32.totalorder %s54, %s55
      %p67 = scmp.eq.s32.totalorder %s24, 1
      %p68 = por %p66, %p67
      %p70 = scmp.ne.s32.totalorder %s55, %s69
      %p71 = scmp.eq.s32.totalorder %s24, 0
      %p72 = por %p70, %p71
      %s74 = sadd.s32 %s73, 1
      %p77 = scmp.eq.s32.totalorder %s18, 1
      %p78 = scmp.ne.s32.totalorder %s73, %s75
      %p79 = scmp.eq.s32.totalorder %s18, 0
      %p80 = por %p78, %p79
      %p81 = scmp.ne.s32.totalorder %s73, %s75
      %p82 = scmp.eq.s32.totalorder %s23, 1
      %p83 = por %p81, %p82
      %p84 = scmp.ne.s32.totalorder %s75, %s76
      %p85 = scmp.eq.s32.totalorder %s23, 0
      %p86 = por %p84, %p85
      %p87 = scmp.ne.s32.totalorder %s75, %s76
      %p88 = scmp.eq.s32.totalorder %s24, 1
      %p89 = por %p87, %p88
      %p91 = scmp.ne.s32.totalorder %s76, %s90
      %p92 = scmp.eq.s32.totalorder %s24, 0
      %p93 = por %p91, %p92
      %s95 = sadd.s32 %s94, 1
      %p98 = scmp.eq.s32.totalorder %s18, 1
      %p99 = scmp.ne.s32.totalorder %s94, %s96
      %p100 = scmp.eq.s32.totalorder %s18, 0
      %p101 = por %p99, %p100
      %p102 = scmp.ne.s32.totalorder %s94, %s96
      %p103 = scmp.eq.s32.totalorder %s23, 1
      %p104 = por %p102, %p103
      %p105 = scmp.ne.s32.totalorder %s96, %s97
      %p106 = scmp.eq.s32.totalorder %s23, 0
      %p107 = por %p105, %p106
      %p108 = scmp.ne.s32.totalorder %s96, %s97
      %p109 = scmp.eq.s32.totalorder %s24, 1
      %p110 = por %p108, %p109
      %p112 = scmp.ne.s32.totalorder %s97, %s111
      %p113 = scmp.eq.s32.totalorder %s24, 0
      %p114 = por %p112, %p113
      %s116 = sadd.s32 %s115, 1
      %p119 = scmp.eq.s32.totalorder %s18, 1
      %p120 = scmp.ne.s32.totalorder %s115, %s117
      %p121 = scmp.eq.s32.totalorder %s18, 0
      %p122 = por %p120, %p121
      %p123 = scmp.ne.s32.totalorder %s115, %s117
      %p124 = scmp.eq.s32.totalorder %s23, 1
      %p125 = por %p123, %p124
      %p126 = scmp.ne.s32.totalorder %s117, %s118
      %p127 = scmp.eq.s32.totalorder %s23, 0
      %p128 = por %p126, %p127
      %p129 = scmp.ne.s32.totalorder %s117, %s118
      %p130 = scmp.eq.s32.totalorder %s24, 1
      %p131 = por %p129, %p130
      %p133 = scmp.ne.s32.totalorder %s118, %s132
      %p134 = scmp.eq.s32.totalorder %s24, 0
      %p135 = por %p133, %p134
      %s136 = ssub.s32 %s18, %s25
      %p137 = scmp.eq.s32.totalorder %s136, 0
      %s139 = sadd.s32 %s138, 1
      %s140 = scalar_select %p137, %s138, %s139
      %p143 = pneg %p137
      %p144 = scmp.eq.s32.totalorder %s18, 1
      %p145 = por %p143, %p144
      %p146 = scmp.ne.s32.totalorder %s138, %s141
      %p147 = scmp.eq.s32.totalorder %s18, 0
      %p148 = por %p146, %p147
      %p149 = scmp.ne.s32.totalorder %s138, %s141
      %p150 = scmp.eq.s32.totalorder %s23, 1
      %p151 = por %p149, %p150
      %p152 = scmp.ne.s32.totalorder %s141, %s142
      %p153 = scmp.eq.s32.totalorder %s23, 0
      %p154 = por %p152, %p153
      %p155 = scmp.ne.s32.totalorder %s141, %s142
      %p156 = scmp.eq.s32.totalorder %s24, 1
      %p157 = por %p155, %p156
      %p159 = scmp.ne.s32.totalorder %s142, %s158
      %p160 = scmp.eq.s32.totalorder %s24, 0
      %p161 = por %p159, %p160
      %p162 = scmp.le.s32.totalorder 1, %s18
      %p163 = scmp.lt.s32.totalorder %s18, 3
      %p164 = pnand %p162, %p163
      %p165 = pneg %p164
      // Predicated region
      $region9: #{tpu_custom_call.1} parent=5 // pred_check
        _
      $region10: #{tpu_custom_call.1} parent=5 // pred_check_branch
        %167 = sbr.rel (%p164) target = $region12
      $region11: #{tpu_custom_call.1} parent=5 // pred_region
        %s168 = ssub.s32 %s18, 1
        // Predicated region
        $region13: #{tpu_custom_call.1} parent=11 // pred_check
          %p169 = pneg %p65
        $region14: #{tpu_custom_call.1} parent=11 // pred_check_branch
          %171 = sbr.rel (%p169) target = $region16
        $region15: #{tpu_custom_call.1} parent=11 // pred_region
          %s173 = ssub.s32 2048, 2048
          %174 = vsyncadd [#allocation6], %s173
          %s175 = sshll.u32 [#allocation5], 4
          %s176 = int_to_ptr.vmem [resolvable:$true] %s175
          %181 = dma.hbm_to_vmem [thread:$0]  %s1, 2048, %s176, [#allocation6], 128, 128, 8
        $region16: #{tpu_custom_call.1} parent=11 // pred_fallthru
          _
        // Predicated region
        $region17: #{tpu_custom_call.1} parent=11 // pred_check
          %p182 = pneg %p86
        $region18: #{tpu_custom_call.1} parent=11 // pred_check_branch
          %184 = sbr.rel (%p182) target = $region20
        $region19: #{tpu_custom_call.1} parent=11 // pred_region
          _
        $region20: #{tpu_custom_call.1} parent=11 // pred_fallthru
          _
        // Predicated region
        $region21: #{tpu_custom_call.1} parent=11 // pred_check
          %p185 = pneg %p107
        $region22: #{tpu_custom_call.1} parent=11 // pred_check_branch
          %187 = sbr.rel (%p185) target = $region24
        $region23: #{tpu_custom_call.1} parent=11 // pred_region
          %s189 = ssub.s32 2048, 2048
          %190 = vsyncadd [#allocation6], %s189
          %s191 = sshll.u32 [#allocation7], 4
          %s192 = int_to_ptr.vmem [resolvable:$true] %s191
          %197 = dma.hbm_to_vmem [thread:$0]  %s3, 2048, %s192, [#allocation6], 128, 128, 8
        $region24: #{tpu_custom_call.1} parent=11 // pred_fallthru
          _
        // Predicated region
        $region25: #{tpu_custom_call.1} parent=11 // pred_check
          %p198 = pneg %p128
        $region26: #{tpu_custom_call.1} parent=11 // pred_check_branch
          %200 = sbr.rel (%p198) target = $region28
        $region27: #{tpu_custom_call.1} parent=11 // pred_region
          _
        $region28: #{tpu_custom_call.1} parent=11 // pred_fallthru
          _
      $region12: #{tpu_custom_call.1} parent=5 // pred_fallthru
        _
      %p201 = scmp.lt.s32.totalorder %s18, 2
      // Predicated region
      $region29: #{tpu_custom_call.1} parent=5 // pred_check
        %p202 = pneg %p201
      $region30: #{tpu_custom_call.1} parent=5 // pred_check_branch
        %204 = sbr.rel (%p202) target = $region32
      $region31: #{tpu_custom_call.1} parent=5 // pred_region
        // Predicated region
        $region33: #{tpu_custom_call.1} parent=31 // pred_check
          %p205 = pneg %p38
        $region34: #{tpu_custom_call.1} parent=31 // pred_check_branch
          %207 = sbr.rel (%p205) target = $region36
        $region35: #{tpu_custom_call.1} parent=31 // pred_region
          %s208 = sand.u32 %s28, 1
          %s209 = scalar_lea.sflag [#allocation3], %s208
          %s210 = sand.u32 %s28, 1
          %s211 = smul.addr %s210, 8
          %s212 = scalar_lea.vmem [#allocation2], %s211
          %s214 = ssub.s32 128, 128
          %215 = vsyncadd %s209, %s214
          %s216 = smul.addr %s18, 128
          %s217 = scalar_lea.hbm %s0, %s216
          %s219 = sshll.u32 %s212, 4
          %s220 = int_to_ptr.vmem [resolvable:$true] %s219
          %222 = dma.hbm_to_vmem [thread:$0]  %s217, 128, %s220, %s209
        $region36: #{tpu_custom_call.1} parent=31 // pred_fallthru
          _
      $region32: #{tpu_custom_call.1} parent=5 // pred_fallthru
        _
      %p223 = scmp.le.s32.totalorder 1, %s18
      %p224 = scmp.lt.s32.totalorder %s18, 3
      %p225 = pnand %p223, %p224
      %p226 = pneg %p225
      // Predicated region
      $region37: #{tpu_custom_call.1} parent=5 // pred_check
        _
      $region38: #{tpu_custom_call.1} parent=5 // pred_check_branch
        %228 = sbr.rel (%p225) target = $region40
      $region39: #{tpu_custom_call.1} parent=5 // pred_region
        %s229 = ssub.s32 %s18, 1
        %s230 = sand.u32 %s31, 1
        %s231 = scalar_lea.sflag [#allocation3], %s230
        %s232 = sand.u32 %s31, 1
        %s233 = smul.addr %s232, 8
        %s234 = scalar_lea.vmem [#allocation2], %s233
        // Predicated region
        $region41: #{tpu_custom_call.1} parent=39 // pred_check
          %p235 = pneg %p44
        $region42: #{tpu_custom_call.1} parent=39 // pred_check_branch
          %237 = sbr.rel (%p235) target = $region44
        $region43: #{tpu_custom_call.1} parent=39 // pred_region
          %238 = dma.done %s231, 128
        $region44: #{tpu_custom_call.1} parent=39 // pred_fallthru
          _
        // Predicated region
        $region45: #{tpu_custom_call.1} parent=39 // pred_check
          %p239 = pneg %p65
        $region46: #{tpu_custom_call.1} parent=39 // pred_check_branch
          %241 = sbr.rel (%p239) target = $region48
        $region47: #{tpu_custom_call.1} parent=39 // pred_region
          %242 = dma.done [#allocation6], 2048
        $region48: #{tpu_custom_call.1} parent=39 // pred_fallthru
          _
        // Predicated region
        $region49: #{tpu_custom_call.1} parent=39 // pred_check
          %p243 = pneg %p107
        $region50: #{tpu_custom_call.1} parent=39 // pred_check_branch
          %245 = sbr.rel (%p243) target = $region52
        $region51: #{tpu_custom_call.1} parent=39 // pred_region
          %246 = dma.done [#allocation6], 2048
        $region52: #{tpu_custom_call.1} parent=39 // pred_fallthru
          _
        %s247 = sand.u32 %s31, 1
        %s248 = scalar_lea.sflag [#allocation3], %s247
        %s249 = sand.u32 %s31, 1
        %s250 = smul.addr %s249, 8
        %s251 = scalar_lea.vmem [#allocation2], %s250
        %p252 = pneg %p44
        %p253 = pneg %p41
        %p254 = pneg %p65
        %p255 = pneg %p62
        %p256 = pneg %p86
        %p257 = pneg %p83
        %p258 = pneg %p107
        %p259 = pneg %p104
        %p260 = pneg %p128
        %p261 = pneg %p125
        %p262 = pneg %p154
        %p263 = pneg %p151
        %s264 = sand.u32 %s141, 1
        %s265 = scalar_lea.sflag [#allocation4], %s264
        %s266 = sand.u32 %s141, 1
        %s267 = smul.addr %s266, 8
        %s268 = scalar_lea.vmem [#allocation8], %s267
        %v269 = vld [vmem:[%s234] sm:$0xff]
        %v270 = vld [vmem:[#allocation5] sm:$0xff]
        %v271 = vld [vmem:[#allocation5 + $0x8] sm:$0xff]
        %v272 = vld [vmem:[#allocation5 + $0x10] sm:$0xff]
        %v273 = vld [vmem:[#allocation5 + $0x18] sm:$0xff]
        %v274 = vld [vmem:[#allocation5 + $0x20] sm:$0xff]
        %v275 = vld [vmem:[#allocation5 + $0x28] sm:$0xff]
        %v276 = vld [vmem:[#allocation5 + $0x30] sm:$0xff]
        %v277 = vld [vmem:[#allocation5 + $0x38] sm:$0xff]
        %v278 = vld [vmem:[#allocation5 + $0x40] sm:$0xff]
        %v279 = vld [vmem:[#allocation5 + $0x48] sm:$0xff]
        %v280 = vld [vmem:[#allocation5 + $0x50] sm:$0xff]
        %v281 = vld [vmem:[#allocation5 + $0x58] sm:$0xff]
        %v282 = vld [vmem:[#allocation5 + $0x60] sm:$0xff]
        %v283 = vld [vmem:[#allocation5 + $0x68] sm:$0xff]
        %v284 = vld [vmem:[#allocation5 + $0x70] sm:$0xff]
        %v285 = vld [vmem:[#allocation5 + $0x78] sm:$0xff]
        %v286 = vld [vmem:[%s2] sm:$0x1]
        %v288 = vlaneseq
        %v289 = vshrl.u32 %v288, 7
        %v290 = vsub.s32 0, %v289
        %v291 = vrot.slane %v286, %v290
        %293 = vmatprep.subr.mxu0 0.0
        %294 = vmatpush1.msra.mxu0 %v285
        %295 = vmatprep.subr.mxu0 0.0
        %296 = vmatpush1.msra.mxu0 %v284
        %297 = vmatprep.subr.mxu0 0.0
        %298 = vmatpush1.msra.mxu0 %v283
        %299 = vmatprep.subr.mxu0 0.0
        %300 = vmatpush1.msra.mxu0 %v282
        %301 = vmatprep.subr.mxu0 0.0
        %302 = vmatpush1.msra.mxu0 %v281
        %303 = vmatprep.subr.mxu0 0.0
        %304 = vmatpush1.msra.mxu0 %v280
        %305 = vmatprep.subr.mxu0 0.0
        %306 = vmatpush1.msra.mxu0 %v279
        %307 = vmatprep.subr.mxu0 0.0
        %308 = vmatpush1.msra.mxu0 %v278
        %309 = vmatprep.subr.mxu0 0.0
        %310 = vmatpush1.msra.mxu0 %v277
        %311 = vmatprep.subr.mxu0 0.0
        %312 = vmatpush1.msra.mxu0 %v276
        %313 = vmatprep.subr.mxu0 0.0
        %314 = vmatpush1.msra.mxu0 %v275
        %315 = vmatprep.subr.mxu0 0.0
        %316 = vmatpush1.msra.mxu0 %v274
        %317 = vmatprep.subr.mxu0 0.0
        %318 = vmatpush1.msra.mxu0 %v273
        %319 = vmatprep.subr.mxu0 0.0
        %320 = vmatpush1.msra.mxu0 %v272
        %321 = vmatprep.subr.mxu0 0.0
        %322 = vmatpush1.msra.mxu0 %v271
        %323 = vmatprep.subr.mxu0 0.0
        %324 = vmatpush1.msra.mxu0 %v270
        %325 = vmatprep.subr.mxu0 0.0
        %326 = vmatpush2.msra.mxu0 0.0
        %327 = vmatprep.subr.mxu0 0.0
        %328 = vmatpush2.msra.mxu0 0.0
        %329 = vmatprep.subr.mxu0 0.0
        %330 = vmatpush2.msra.mxu0 0.0
        %331 = vmatprep.subr.mxu0 0.0
        %332 = vmatpush2.msra.mxu0 0.0
        %333 = vmatprep.subr.mxu0 0.0
        %334 = vmatpush2.msra.mxu0 0.0
        %335 = vmatprep.subr.mxu0 0.0
        %336 = vmatpush2.msra.mxu0 0.0
        %337 = vmatprep.subr.mxu0 0.0
        %338 = vmatpush2.msra.mxu0 0.0
        %339 = vmatprep.subr.mxu0 0.0
        %340 = vmatpush2.msra.mxu0 0.0
        %341 = vmatprep.subr.mxu0 0.0
        %342 = vmatpush2.msra.mxu0 0.0
        %343 = vmatprep.subr.mxu0 0.0
        %344 = vmatpush2.msra.mxu0 0.0
        %345 = vmatprep.subr.mxu0 0.0
        %346 = vmatpush2.msra.mxu0 0.0
        %347 = vmatprep.subr.mxu0 0.0
        %348 = vmatpush2.msra.mxu0 0.0
        %349 = vmatprep.subr.mxu0 0.0
        %350 = vmatpush2.msra.mxu0 0.0
        %351 = vmatprep.subr.mxu0 0.0
        %352 = vmatpush2.msra.mxu0 0.0
        %353 = vmatprep.subr.mxu0 0.0
        %354 = vmatpush2.msra.mxu0 0.0
        %355 = vmatprep.subr.mxu0 0.0
        %356 = vmatpush2.msra.mxu0 0.0
        %357 = vmatprep.mubr.f32.mxu0 0.0
        %358 = vmatmul.mubr.f32.gmra.mxu0 %v269
        %v359 = vpop.f32.mrf.mxu0
        %v360 = vadd.f32 %v291, %v359
        %v361 = vpop.f32.mrf.mxu0
        %362 = vdwg.mxu0
        %vm363 = vcmp.gt.f32.partialorder %v360, 0.0
        %v364 = vmul.f32 %v360, 0.2
        %v365 = vsel %vm363, %v360, %v364
        %v366 = vld [vmem:[#allocation7] sm:$0xff]
        %v367 = vld [vmem:[#allocation7 + $0x8] sm:$0xff]
        %v368 = vld [vmem:[#allocation7 + $0x10] sm:$0xff]
        %v369 = vld [vmem:[#allocation7 + $0x18] sm:$0xff]
        %v370 = vld [vmem:[#allocation7 + $0x20] sm:$0xff]
        %v371 = vld [vmem:[#allocation7 + $0x28] sm:$0xff]
        %v372 = vld [vmem:[#allocation7 + $0x30] sm:$0xff]
        %v373 = vld [vmem:[#allocation7 + $0x38] sm:$0xff]
        %v374 = vld [vmem:[#allocation7 + $0x40] sm:$0xff]
        %v375 = vld [vmem:[#allocation7 + $0x48] sm:$0xff]
        %v376 = vld [vmem:[#allocation7 + $0x50] sm:$0xff]
        %v377 = vld [vmem:[#allocation7 + $0x58] sm:$0xff]
        %v378 = vld [vmem:[#allocation7 + $0x60] sm:$0xff]
        %v379 = vld [vmem:[#allocation7 + $0x68] sm:$0xff]
        %v380 = vld [vmem:[#allocation7 + $0x70] sm:$0xff]
        %v381 = vld [vmem:[#allocation7 + $0x78] sm:$0xff]
        %v382 = vld [vmem:[%s4] sm:$0x1]
        %v384 = vlaneseq
        %v385 = vshrl.u32 %v384, 7
        %v386 = vsub.s32 0, %v385
        %v387 = vrot.slane %v382, %v386
        %389 = vmatprep.subr.mxu0 0.0
        %390 = vmatpush1.msra.mxu0 %v381
        %391 = vmatprep.subr.mxu0 0.0
        %392 = vmatpush1.msra.mxu0 %v380
        %393 = vmatprep.subr.mxu0 0.0
        %394 = vmatpush1.msra.mxu0 %v379
        %395 = vmatprep.subr.mxu0 0.0
        %396 = vmatpush1.msra.mxu0 %v378
        %397 = vmatprep.subr.mxu0 0.0
        %398 = vmatpush1.msra.mxu0 %v377
        %399 = vmatprep.subr.mxu0 0.0
        %400 = vmatpush1.msra.mxu0 %v376
        %401 = vmatprep.subr.mxu0 0.0
        %402 = vmatpush1.msra.mxu0 %v375
        %403 = vmatprep.subr.mxu0 0.0
        %404 = vmatpush1.msra.mxu0 %v374
        %405 = vmatprep.subr.mxu0 0.0
        %406 = vmatpush1.msra.mxu0 %v373
        %407 = vmatprep.subr.mxu0 0.0
        %408 = vmatpush1.msra.mxu0 %v372
        %409 = vmatprep.subr.mxu0 0.0
        %410 = vmatpush1.msra.mxu0 %v371
        %411 = vmatprep.subr.mxu0 0.0
        %412 = vmatpush1.msra.mxu0 %v370
        %413 = vmatprep.subr.mxu0 0.0
        %414 = vmatpush1.msra.mxu0 %v369
        %415 = vmatprep.subr.mxu0 0.0
        %416 = vmatpush1.msra.mxu0 %v368
        %417 = vmatprep.subr.mxu0 0.0
        %418 = vmatpush1.msra.mxu0 %v367
        %419 = vmatprep.subr.mxu0 0.0
        %420 = vmatpush1.msra.mxu0 %v366
        %421 = vmatprep.subr.mxu0 0.0
        %422 = vmatpush2.msra.mxu0 0.0
        %423 = vmatprep.subr.mxu0 0.0
        %424 = vmatpush2.msra.mxu0 0.0
        %425 = vmatprep.subr.mxu0 0.0
        %426 = vmatpush2.msra.mxu0 0.0
        %427 = vmatprep.subr.mxu0 0.0
        %428 = vmatpush2.msra.mxu0 0.0
        %429 = vmatprep.subr.mxu0 0.0
        %430 = vmatpush2.msra.mxu0 0.0
        %431 = vmatprep.subr.mxu0 0.0
        %432 = vmatpush2.msra.mxu0 0.0
        %433 = vmatprep.subr.mxu0 0.0
        %434 = vmatpush2.msra.mxu0 0.0
        %435 = vmatprep.subr.mxu0 0.0
        %436 = vmatpush2.msra.mxu0 0.0
        %437 = vmatprep.subr.mxu0 0.0
        %438 = vmatpush2.msra.mxu0 0.0
        %439 = vmatprep.subr.mxu0 0.0
        %440 = vmatpush2.msra.mxu0 0.0
        %441 = vmatprep.subr.mxu0 0.0
        %442 = vmatpush2.msra.mxu0 0.0
        %443 = vmatprep.subr.mxu0 0.0
        %444 = vmatpush2.msra.mxu0 0.0
        %445 = vmatprep.subr.mxu0 0.0
        %446 = vmatpush2.msra.mxu0 0.0
        %447 = vmatprep.subr.mxu0 0.0
        %448 = vmatpush2.msra.mxu0 0.0
        %449 = vmatprep.subr.mxu0 0.0
        %450 = vmatpush2.msra.mxu0 0.0
        %451 = vmatprep.subr.mxu0 0.0
        %452 = vmatpush2.msra.mxu0 0.0
        %453 = vmatprep.mubr.f32.mxu0 0.0
        %454 = vmatmul.mubr.f32.gmra.mxu0 %v365
        %v455 = vpop.f32.mrf.mxu0
        %v456 = vadd.f32 %v387, %v455
        %v457 = vpop.f32.mrf.mxu0
        %458 = vdwg.mxu0
        %v459 = vadd.f32 %v269, %v456
        %vm460 = vcmp.gt.f32.partialorder %v459, 0.0
        %v461 = vmul.f32 %v459, 0.2
        %v462 = vsel %vm460, %v459, %v461
        %463 = vst [vmem:[%s268] sm:$0xff] %v462
        %s464 = sand.u32 %s141, 1
        %s465 = scalar_lea.sflag [#allocation4], %s464
        %s466 = sand.u32 %s141, 1
        %s467 = smul.addr %s466, 8
        %s468 = scalar_lea.vmem [#allocation8], %s467
        // Predicated region
        $region53: #{tpu_custom_call.1} parent=39 // pred_check
          %p469 = pneg %p151
        $region54: #{tpu_custom_call.1} parent=39 // pred_check_branch
          %471 = sbr.rel (%p469) target = $region56
        $region55: #{tpu_custom_call.1} parent=39 // pred_region
          %s473 = ssub.s32 128, 128
          %474 = vsyncadd %s465, %s473
          %s475 = smul.addr %s23, 128
          %s476 = scalar_lea.hbm %s5, %s475
          %s478 = sshll.u32 %s468, 4
          %s479 = int_to_ptr.vmem [resolvable:$true] %s478
          %481 = dma.vmem_to_hbm [thread:$0]  %s479, 128, %s476, %s465
        $region56: #{tpu_custom_call.1} parent=39 // pred_fallthru
          _
      $region40: #{tpu_custom_call.1} parent=5 // pred_fallthru
        _
      %p482 = scmp.le.s32.totalorder 2, %s18
      // Predicated region
      $region57: #{tpu_custom_call.1} parent=5 // pred_check
        %p483 = pneg %p482
      $region58: #{tpu_custom_call.1} parent=5 // pred_check_branch
        %485 = sbr.rel (%p483) target = $region60
      $region59: #{tpu_custom_call.1} parent=5 // pred_region
        %s486 = ssub.s32 %s18, 2
        // Predicated region
        $region61: #{tpu_custom_call.1} parent=59 // pred_check
          %p487 = pneg %p157
        $region62: #{tpu_custom_call.1} parent=59 // pred_check_branch
          %489 = sbr.rel (%p487) target = $region64
        $region63: #{tpu_custom_call.1} parent=59 // pred_region
          %s490 = sand.u32 %s142, 1
          %s491 = scalar_lea.sflag [#allocation4], %s490
          %s492 = sand.u32 %s142, 1
          %s493 = smul.addr %s492, 8
          %s494 = scalar_lea.vmem [#allocation8], %s493
          %495 = dma.done %s491, 128
        $region64: #{tpu_custom_call.1} parent=59 // pred_fallthru
          _
      $region60: #{tpu_custom_call.1} parent=5 // pred_fallthru
        _
    $region6: #{tpu_custom_call.1} parent=1 // loop_footer
      %s22 = sadd.s32 1, %s18
    $region7: #{tpu_custom_call.1} parent=1 // loop_footer_branch
      %17 = sbr.rel target = $region3
    $region8: #{tpu_custom_call.1} parent=1 // loop_exit
      _
    %496 = vsyncpa [#allocation3], 1
    %s497 = scalar_lea.sflag [#allocation3], 1
    %498 = vsyncpa %s497, 1
    %499 = vsyncpa [#allocation6], 1
    %500 = vsyncpa [#allocation4], 1
    %s501 = scalar_lea.sflag [#allocation4], 1
    %502 = vsyncpa %s501, 1

</llo_original>
